<compile_context>
chip_gen: v6e
topology: v6e:2x2x1
jax: 0.10.0
libtpu: 0.0.40
codegen_flags: <defaults>
</compile_context>

<pallas_src>
import jax
import jax.numpy as jnp
from jax.experimental import pallas as pl
from jax.experimental.pallas import tpu as pltpu


def _round_up(x, m):
    return ((x + m - 1) // m) * m


def _cdiv(a, b):
    return (a + b - 1) // b


def latent_state_transition_mlp(h, g_fwd, params, z_dim, *, block_batch=4096):
    """Pallas forward pass. Returns (mu, logvar), each (batch, z_dim) f32."""
    w0, b0, w1, b1, w2, b2 = params

    batch, dz = h.shape
    _, dx = g_fwd.shape
    d_in = dz + dx
    assert w0.shape[0] == d_in
    h0 = w0.shape[1]
    h1 = w1.shape[1]
    d_out = w2.shape[1]            # 2 * z_dim
    assert d_out == 2 * z_dim

    # ---- Feature-major (lane-dense) activations: batch on the lane axis. ----
    # These two transposes move 8 rows * batch f32 each -- the same wrapper
    # traffic the old concat paid, but they buy unmasked stores and ~8x fewer
    # vregs through the VPU / EUP / vld / vst slots inside the kernel.
    hT = h.T.astype(jnp.float32)            # (dz, batch)
    gT = g_fwd.T.astype(jnp.float32)        # (dx, batch)

    # Pre-split + pre-transpose w0 once (1 KiB): layer 0 becomes two dots
    # summed in registers, so the activation stream is never concatenated.
    w0zT = w0[:dz].T.astype(jnp.float32)    # (h0, dz)
    w0xT = w0[dz:].T.astype(jnp.float32)    # (h0, dx)
    w1T = w1.T.astype(jnp.float32)          # (h1, h0)
    w2T = w2.T.astype(jnp.float32)          # (d_out, h1)

    # Pack the three biases into one resident (hmax, 3) column array
    # (feature-major => biases broadcast along the lane/batch axis).
    hmax = max(h0, h1, d_out)
    b_pack = jnp.zeros((hmax, 3), jnp.float32)
    b_pack = b_pack.at[:h0, 0].set(b0.astype(jnp.float32))
    b_pack = b_pack.at[:h1, 1].set(b1.astype(jnp.float32))
    b_pack = b_pack.at[:d_out, 2].set(b2.astype(jnp.float32))

    # ---- Batch (lane) tile size: biggest tile that makes sense. ----
    if batch >= 128:
        tb = min(_round_up(block_batch, 128), _round_up(batch, 128))
        if batch >= 256:
            # Keep >= 2 tiles so the "parallel" grid axis can split the batch
            # across v7x's two TensorCores (no-op on single-TC v5e/v6e).
            tb = min(tb, _round_up(_cdiv(batch, 2), 128))
    else:
        # Tiny batch: one block equal to the full (un-tiled) lane extent.
        tb = batch
    num_tiles = _cdiv(batch, tb)            # ragged last tile handled by masked stores

    def kernel(hT_ref, gT_ref, w0z_ref, w0x_ref, w1_ref, w2_ref, b_ref, out_ref):
        b = b_ref[...]                       # (hmax, 3); static slices below are free
        # Layer 0: two MXU passes (K=dz, K=dx) summed -- same cost as one K=d_in pass.
        a = (jnp.dot(w0z_ref[...], hT_ref[...], preferred_element_type=jnp.float32)
             + jnp.dot(w0x_ref[...], gT_ref[...], preferred_element_type=jnp.float32)
             + b[:h0, 0:1])
        a = jnp.tanh(a)                      # (h0, tb), lane-dense vregs
        a = jnp.tanh(jnp.dot(w1_ref[...], a, preferred_element_type=jnp.float32)
                     + b[:h1, 1:2])          # (h1, tb)
        out = (jnp.dot(w2_ref[...], a, preferred_element_type=jnp.float32)
               + b[:d_out, 2:3])             # (d_out, tb)
        out_ref[...] = out.astype(out_ref.dtype)   # unmasked lane-dense store

    out_t = pl.pallas_call(
        kernel,
        out_shape=jax.ShapeDtypeStruct((d_out, batch), jnp.float32),
        grid=(num_tiles,),
        in_specs=[
            # Activations stream tile-by-tile along the batch/lane axis.
            pl.BlockSpec((dz, tb), lambda i: (0, i)),
            pl.BlockSpec((dx, tb), lambda i: (0, i)),
            # Weights + packed biases: constant index_map -> VMEM-resident.
            pl.BlockSpec((h0, dz), lambda i: (0, 0)),
            pl.BlockSpec((h0, dx), lambda i: (0, 0)),
            pl.BlockSpec((h1, h0), lambda i: (0, 0)),
            pl.BlockSpec((d_out, h1), lambda i: (0, 0)),
            pl.BlockSpec((hmax, 3), lambda i: (0, 0)),
        ],
        out_specs=pl.BlockSpec((d_out, tb), lambda i: (0, i)),
        compiler_params=pltpu.CompilerParams(
            dimension_semantics=("parallel",),   # v7x: shard batch tiles over 2 TCs
            vmem_limit_bytes=32 * 1024 * 1024,   # explicit; footprint is only ~KiB-MiB
        ),
    )(hT, gT, w0zT, w0xT, w1T, w2T, b_pack)

    # (2*z_dim, batch) -> (batch, z_dim) x 2.  Transposing an 8-row slab in the
    # wrapper is far cheaper than paying the masked-store tax inside the kernel.
    mu = out_t[:z_dim].T
    logvar = out_t[z_dim:].T
    return mu, logvar


def init_params(key, z_dim, rnn_z_hidden_dim, rnn_x_hidden_dim, layers_dim):
    """Deterministic PyTorch-style (uniform +-1/sqrt(fan_in)) init, weights (in, out)."""
    dims = [rnn_z_hidden_dim + rnn_x_hidden_dim] + list(layers_dim) + [2 * z_dim]
    params = []
    for i in range(len(dims) - 1):
        fan_in, fan_out = dims[i], dims[i + 1]
        key, kw, kb = jax.random.split(key, 3)
        bound = 1.0 / jnp.sqrt(fan_in)
        w = jax.random.uniform(kw, (fan_in, fan_out), jnp.float32, -bound, bound)
        b = jax.random.uniform(kb, (fan_out,), jnp.float32, -bound, bound)
        params += [w, b]
    return tuple(params)


def reference_forward(h, g_fwd, params, z_dim):
    """Pure-JAX reference for correctness check."""
    w0, b0, w1, b1, w2, b2 = params
    x = jnp.concatenate([h, g_fwd], axis=1)
    x = jnp.tanh(x @ w0 + b0)
    x = jnp.tanh(x @ w1 + b1)
    out = x @ w2 + b2
    return out[:, :z_dim], out[:, z_dim:]


if __name__ == "__main__":
    z_dim = 4
    rnn_z_hidden_dim = 8
    rnn_x_hidden_dim = 8
    layers_dim = [16, 16]  # default: two hidden layers of default_num_units=16

    key = jax.random.PRNGKey(0)
    k_h, k_g, k_p, k_h2, k_g2 = jax.random.split(key, 5)
    params = init_params(k_p, z_dim, rnn_z_hidden_dim, rnn_x_hidden_dim, layers_dim)

    # --- Case 1: the module's nominal per-timestep call (batch=2). ---
    batch = 2
    h = jax.random.normal(k_h, (batch, rnn_z_hidden_dim), jnp.float32)
    g_fwd = jax.random.normal(k_g, (batch, rnn_x_hidden_dim), jnp.float32)

    mu, logvar = latent_state_transition_mlp(h, g_fwd, params, z_dim)
    jax.block_until_ready((mu, logvar))

    mu_ref, logvar_ref = reference_forward(h, g_fwd, params, z_dim)
    assert mu.shape == (batch, z_dim) and logvar.shape == (batch, z_dim)
    assert jnp.allclose(mu, mu_ref, atol=1e-5, rtol=1e-5)
    assert jnp.allclose(logvar, logvar_ref, atol=1e-5, rtol=1e-5)

    # --- Case 2: bigger ragged batch exercising the multi-tile + masked
    #     ragged-last-tile path (no pad / slice anywhere in the wrapper). ---
    batch2 = 300
    h2 = jax.random.normal(k_h2, (batch2, rnn_z_hidden_dim), jnp.float32)
    g2 = jax.random.normal(k_g2, (batch2, rnn_x_hidden_dim), jnp.float32)

    mu2, logvar2 = latent_state_transition_mlp(h2, g2, params, z_dim,
                                               block_batch=128)
    jax.block_until_ready((mu2, logvar2))

    mu2_ref, logvar2_ref = reference_forward(h2, g2, params, z_dim)
    assert mu2.shape == (batch2, z_dim) and logvar2.shape == (batch2, z_dim)
    assert jnp.allclose(mu2, mu2_ref, atol=1e-5, rtol=1e-5)
    assert jnp.allclose(logvar2, logvar2_ref, atol=1e-5, rtol=1e-5)

    # --- Case 3: large batch with the default tile size (>=2 tiles so the
    #     "parallel" axis can split across v7x's two TensorCores). ---
    batch3 = 5000
    h3 = jax.random.normal(k_h, (batch3, rnn_z_hidden_dim), jnp.float32)
    g3 = jax.random.normal(k_g, (batch3, rnn_x_hidden_dim), jnp.float32)
    mu3, logvar3 = latent_state_transition_mlp(h3, g3, params, z_dim)
    jax.block_until_ready((mu3, logvar3))
    mu3_ref, logvar3_ref = reference_forward(h3, g3, params, z_dim)
    assert jnp.allclose(mu3, mu3_ref, atol=1e-5, rtol=1e-5)
    assert jnp.allclose(logvar3, logvar3_ref, atol=1e-5, rtol=1e-5)

    print("KERNEL_OK")
</pallas_src>

<mosaic_0001>
module attributes {stable_mosaic.version = 11 : i64} {
  func.func @kernel(%arg0: i32, %arg1: memref<8x2xf32, #tpu.memory_space<vmem>>, %arg2: memref<8x2xf32, #tpu.memory_space<vmem>>, %arg3: memref<16x8xf32, #tpu.memory_space<vmem>>, %arg4: memref<16x8xf32, #tpu.memory_space<vmem>>, %arg5: memref<16x16xf32, #tpu.memory_space<vmem>>, %arg6: memref<8x16xf32, #tpu.memory_space<vmem>>, %arg7: memref<16x3xf32, #tpu.memory_space<vmem>>, %arg8: memref<8x2xf32, #tpu.memory_space<vmem>>) attributes {dimension_semantics = [#tpu.dimension_semantics<parallel>], iteration_bounds = array<i64: 1>, scalar_prefetch = 0 : i64, scratch_operands = 0 : i64, tpu.core_type = #tpu.core_type<tc>, window_params = [{transform_indices = @transform_0, window_bounds = array<i64: 8, 2>}, {transform_indices = @transform_1, window_bounds = array<i64: 8, 2>}, {pipeline_mode = #tpu.pipeline_mode<synchronous>, transform_indices = @transform_2, window_bounds = array<i64: 16, 8>}, {pipeline_mode = #tpu.pipeline_mode<synchronous>, transform_indices = @transform_3, window_bounds = array<i64: 16, 8>}, {pipeline_mode = #tpu.pipeline_mode<synchronous>, transform_indices = @transform_4, window_bounds = array<i64: 16, 16>}, {pipeline_mode = #tpu.pipeline_mode<synchronous>, transform_indices = @transform_5, window_bounds = array<i64: 8, 16>}, {pipeline_mode = #tpu.pipeline_mode<synchronous>, transform_indices = @transform_6, window_bounds = array<i64: 16, 3>}, {transform_indices = @transform_7, window_bounds = array<i64: 8, 2>}]} {
    %c0 = arith.constant 0 : index
    %c0_0 = arith.constant 0 : index
    %0 = vector.load %arg7[%c0, %c0_0] : memref<16x3xf32, #tpu.memory_space<vmem>>, vector<16x3xf32>
    %c0_1 = arith.constant 0 : index
    %c0_2 = arith.constant 0 : index
    %1 = vector.load %arg3[%c0_1, %c0_2] : memref<16x8xf32, #tpu.memory_space<vmem>>, vector<16x8xf32>
    %c0_3 = arith.constant 0 : index
    %c0_4 = arith.constant 0 : index
    %2 = vector.load %arg1[%c0_3, %c0_4] : memref<8x2xf32, #tpu.memory_space<vmem>>, vector<8x2xf32>
    %cst = arith.constant dense<0.000000e+00> : vector<16x2xf32>
    %3 = tpu.matmul %1, %2, %cst {dimension_numbers = #tpu.dot_dimension_numbers<[1], [0], [0], [1], [0, 0, 1, 1], [], []>} : vector<16x8xf32>, vector<8x2xf32>, vector<16x2xf32> -> vector<16x2xf32>
    %c0_5 = arith.constant 0 : index
    %c0_6 = arith.constant 0 : index
    %4 = vector.load %arg4[%c0_5, %c0_6] : memref<16x8xf32, #tpu.memory_space<vmem>>, vector<16x8xf32>
    %c0_7 = arith.constant 0 : index
    %c0_8 = arith.constant 0 : index
    %5 = vector.load %arg2[%c0_7, %c0_8] : memref<8x2xf32, #tpu.memory_space<vmem>>, vector<8x2xf32>
    %cst_9 = arith.constant dense<0.000000e+00> : vector<16x2xf32>
    %6 = tpu.matmul %4, %5, %cst_9 {dimension_numbers = #tpu.dot_dimension_numbers<[1], [0], [0], [1], [0, 0, 1, 1], [], []>} : vector<16x8xf32>, vector<8x2xf32>, vector<16x2xf32> -> vector<16x2xf32>
    %7 = arith.addf %3, %6 : vector<16x2xf32>
    %8 = vector.extract_strided_slice %0 {offsets = [0, 0], sizes = [16, 1], strides = [1, 1]} : vector<16x3xf32> to vector<16x1xf32>
    %9 = vector.broadcast %8 : vector<16x1xf32> to vector<16x2xf32>
    %10 = arith.addf %7, %9 : vector<16x2xf32>
    %11 = math.tanh %10 : vector<16x2xf32>
    %c0_10 = arith.constant 0 : index
    %c0_11 = arith.constant 0 : index
    %12 = vector.load %arg5[%c0_10, %c0_11] : memref<16x16xf32, #tpu.memory_space<vmem>>, vector<16x16xf32>
    %cst_12 = arith.constant dense<0.000000e+00> : vector<16x2xf32>
    %13 = tpu.matmul %12, %11, %cst_12 {dimension_numbers = #tpu.dot_dimension_numbers<[1], [0], [0], [1], [0, 0, 1, 1], [], []>} : vector<16x16xf32>, vector<16x2xf32>, vector<16x2xf32> -> vector<16x2xf32>
    %14 = vector.extract_strided_slice %0 {offsets = [0, 1], sizes = [16, 1], strides = [1, 1]} : vector<16x3xf32> to vector<16x1xf32>
    %15 = vector.broadcast %14 : vector<16x1xf32> to vector<16x2xf32>
    %16 = arith.addf %13, %15 : vector<16x2xf32>
    %17 = math.tanh %16 : vector<16x2xf32>
    %c0_13 = arith.constant 0 : index
    %c0_14 = arith.constant 0 : index
    %18 = vector.load %arg6[%c0_13, %c0_14] : memref<8x16xf32, #tpu.memory_space<vmem>>, vector<8x16xf32>
    %cst_15 = arith.constant dense<0.000000e+00> : vector<8x2xf32>
    %19 = tpu.matmul %18, %17, %cst_15 {dimension_numbers = #tpu.dot_dimension_numbers<[1], [0], [0], [1], [0, 0, 1, 1], [], []>} : vector<8x16xf32>, vector<16x2xf32>, vector<8x2xf32> -> vector<8x2xf32>
    %20 = vector.extract_strided_slice %0 {offsets = [0, 2], sizes = [8, 1], strides = [1, 1]} : vector<16x3xf32> to vector<8x1xf32>
    %21 = vector.broadcast %20 : vector<8x1xf32> to vector<8x2xf32>
    %22 = arith.addf %19, %21 : vector<8x2xf32>
    %c0_16 = arith.constant 0 : index
    %c0_17 = arith.constant 0 : index
    %23 = vector.load %arg8[%c0_16, %c0_17] : memref<8x2xf32, #tpu.memory_space<vmem>>, vector<8x2xf32>
    tpu.vector_store %arg8[%c0_16, %c0_17], %22 {strides = array<i32>} : memref<8x2xf32, #tpu.memory_space<vmem>>, vector<8x2xf32>,
    return
  }
  func.func @transform_0(%arg0: i32) -> (i32, i32) {
    %c0_i32 = arith.constant 0 : i32
    %c0_i32_0 = arith.constant 0 : i32
    return %c0_i32, %arg0 : i32, i32
  }
  func.func @transform_1(%arg0: i32) -> (i32, i32) {
    %c0_i32 = arith.constant 0 : i32
    %c0_i32_0 = arith.constant 0 : i32
    return %c0_i32, %arg0 : i32, i32
  }
  func.func @transform_2(%arg0: i32) -> (i32, i32) {
    %c0_i32 = arith.constant 0 : i32
    %c0_i32_0 = arith.constant 0 : i32
    %c0_i32_1 = arith.constant 0 : i32
    return %c0_i32, %c0_i32_0 : i32, i32
  }
  func.func @transform_3(%arg0: i32) -> (i32, i32) {
    %c0_i32 = arith.constant 0 : i32
    %c0_i32_0 = arith.constant 0 : i32
    %c0_i32_1 = arith.constant 0 : i32
    return %c0_i32, %c0_i32_0 : i32, i32
  }
  func.func @transform_4(%arg0: i32) -> (i32, i32) {
    %c0_i32 = arith.constant 0 : i32
    %c0_i32_0 = arith.constant 0 : i32
    %c0_i32_1 = arith.constant 0 : i32
    return %c0_i32, %c0_i32_0 : i32, i32
  }
  func.func @transform_5(%arg0: i32) -> (i32, i32) {
    %c0_i32 = arith.constant 0 : i32
    %c0_i32_0 = arith.constant 0 : i32
    %c0_i32_1 = arith.constant 0 : i32
    return %c0_i32, %c0_i32_0 : i32, i32
  }
  func.func @transform_6(%arg0: i32) -> (i32, i32) {
    %c0_i32 = arith.constant 0 : i32
    %c0_i32_0 = arith.constant 0 : i32
    %c0_i32_1 = arith.constant 0 : i32
    return %c0_i32, %c0_i32_0 : i32, i32
  }
  func.func @transform_7(%arg0: i32) -> (i32, i32) {
    %c0_i32 = arith.constant 0 : i32
    %c0_i32_0 = arith.constant 0 : i32
    return %c0_i32, %arg0 : i32, i32
  }
}

</mosaic_0001>

<llo_original>
// kernel: tpu_custom_call.1
$region0: #{tpu_custom_call.1}
  #allocation0 [shape = 'u32[]', space=smem, size = 0x4, offset = 0x4, fixed_abs, tag = 'smem constant byte address 0x4 - core index']
  #allocation1 [shape = 'u32[144,128]{1,0:T(1,128)}', space=vmem, size = 0x12000, scoped, tag = 'internal scratch']
  %s0 = inlined_call_operand.vmem [shape: f32[8,2], index: 0, kind: input, shape index: {}]
  %s1 = inlined_call_operand.vmem [shape: f32[8,2], index: 1, kind: input, shape index: {}]
  %s2 = inlined_call_operand.vmem [shape: f32[16,8], index: 2, kind: input, shape index: {}]
  %s3 = inlined_call_operand.vmem [shape: f32[16,8], index: 3, kind: input, shape index: {}]
  %s4 = inlined_call_operand.vmem [shape: f32[16,16], index: 4, kind: input, shape index: {}]
  %s5 = inlined_call_operand.vmem [shape: f32[8,16], index: 5, kind: input, shape index: {}]
  %s6 = inlined_call_operand.vmem [shape: f32[16,3], index: 6, kind: input, shape index: {}]
  %s7 = inlined_call_operand.vmem [shape: f32[8,2], index: 7, kind: output, shape index: {}]
  %s8 = sld [smem:[#allocation0]]
  $region38: #{tpu_custom_call.1} parent=0
    _
  %s10 = ssub.s32 1, %s8
  %s11 = scalar_select 0, %s10, %s8
  // Predicated region
  $region2: #{tpu_custom_call.1} parent=0 // pred_check
    _
  $region3: #{tpu_custom_call.1} parent=0 // pred_check_branch
    %13 = sbr.rel (0) target = $region5
  $region4: #{tpu_custom_call.1} parent=0 // pred_region
    _
  $region5: #{tpu_custom_call.1} parent=0 // pred_fallthru
    _
  // Predicated region
  $region6: #{tpu_custom_call.1} parent=0 // pred_check
    _
  $region7: #{tpu_custom_call.1} parent=0 // pred_check_branch
    %15 = sbr.rel (0) target = $region9
  $region8: #{tpu_custom_call.1} parent=0 // pred_region
    _
  $region9: #{tpu_custom_call.1} parent=0 // pred_fallthru
    _
  // Predicated region
  $region10: #{tpu_custom_call.1} parent=0 // pred_check
    _
  $region11: #{tpu_custom_call.1} parent=0 // pred_check_branch
    %17 = sbr.rel (0) target = $region13
  $region12: #{tpu_custom_call.1} parent=0 // pred_region
    _
  $region13: #{tpu_custom_call.1} parent=0 // pred_fallthru
    _
  // Predicated region
  $region14: #{tpu_custom_call.1} parent=0 // pred_check
    _
  $region15: #{tpu_custom_call.1} parent=0 // pred_check_branch
    %19 = sbr.rel (0) target = $region17
  $region16: #{tpu_custom_call.1} parent=0 // pred_region
    _
  $region17: #{tpu_custom_call.1} parent=0 // pred_fallthru
    _
  // Predicated region
  $region18: #{tpu_custom_call.1} parent=0 // pred_check
    _
  $region19: #{tpu_custom_call.1} parent=0 // pred_check_branch
    %21 = sbr.rel (0) target = $region21
  $region20: #{tpu_custom_call.1} parent=0 // pred_region
    _
  $region21: #{tpu_custom_call.1} parent=0 // pred_fallthru
    _
  // Predicated region
  $region22: #{tpu_custom_call.1} parent=0 // pred_check
    _
  $region23: #{tpu_custom_call.1} parent=0 // pred_check_branch
    %23 = sbr.rel (0) target = $region25
  $region24: #{tpu_custom_call.1} parent=0 // pred_region
    _
  $region25: #{tpu_custom_call.1} parent=0 // pred_fallthru
    _
  // Predicated region
  $region26: #{tpu_custom_call.1} parent=0 // pred_check
    _
  $region27: #{tpu_custom_call.1} parent=0 // pred_check_branch
    %25 = sbr.rel (0) target = $region29
  $region28: #{tpu_custom_call.1} parent=0 // pred_region
    _
  $region29: #{tpu_custom_call.1} parent=0 // pred_fallthru
    _
  %v26 = vld [vmem:[%s6] sm:$0xff]
  %v27 = vld [vmem:[%s6 + $0x8] sm:$0xff]
  %v28 = vld [vmem:[%s2] sm:$0xff]
  %v29 = vld [vmem:[%s2 + $0x8] sm:$0xff]
  %v30 = vld [vmem:[%s0] sm:$0xff]
  %v31 = vld [vmem:[%s3] sm:$0xff]
  %v32 = vld [vmem:[%s3 + $0x8] sm:$0xff]
  %v33 = vld [vmem:[%s1] sm:$0xff]
  %vm34 = vcmask 64512
  %v36 = vsel %vm34, %v31, 0
  %v39 = vsel %vm34, %v32, 0
  %41 = vmatprep.subr.mxu0 0.0
  %42 = vmatpush1.msra.mxu0 0.0
  %43 = vmatprep.subr.mxu0 0.0
  %44 = vmatpush1.msra.mxu0 0.0
  %45 = vmatprep.subr.mxu0 0.0
  %46 = vmatpush1.msra.mxu0 0.0
  %47 = vmatprep.subr.mxu0 0.0
  %48 = vmatpush1.msra.mxu0 0.0
  %49 = vmatprep.subr.mxu0 0.0
  %50 = vmatpush1.msra.mxu0 0.0
  %51 = vmatprep.subr.mxu0 0.0
  %52 = vmatpush1.msra.mxu0 0.0
  %53 = vmatprep.subr.mxu0 0.0
  %54 = vmatpush1.msra.mxu0 0.0
  %55 = vmatprep.subr.mxu0 0.0
  %56 = vmatpush1.msra.mxu0 0.0
  %57 = vmatprep.subr.mxu0 0.0
  %58 = vmatpush1.msra.mxu0 0.0
  %59 = vmatprep.subr.mxu0 0.0
  %60 = vmatpush1.msra.mxu0 0.0
  %61 = vmatprep.subr.mxu0 0.0
  %62 = vmatpush1.msra.mxu0 0.0
  %63 = vmatprep.subr.mxu0 0.0
  %64 = vmatpush1.msra.mxu0 0.0
  %65 = vmatprep.subr.mxu0 0.0
  %66 = vmatpush1.msra.mxu0 0.0
  %67 = vmatprep.subr.mxu0 0.0
  %68 = vmatpush1.msra.mxu0 0.0
  %69 = vmatprep.subr.mxu0 0.0
  %70 = vmatpush1.msra.mxu0 0.0
  %71 = vmatprep.subr.mxu0 0.0
  %72 = vmatpush1.msra.mxu0 %v33
  %73 = vmatprep.subr.mxu0 0.0
  %74 = vmatpush2.msra.mxu0 0.0
  %75 = vmatprep.subr.mxu0 0.0
  %76 = vmatpush2.msra.mxu0 0.0
  %77 = vmatprep.subr.mxu0 0.0
  %78 = vmatpush2.msra.mxu0 0.0
  %79 = vmatprep.subr.mxu0 0.0
  %80 = vmatpush2.msra.mxu0 0.0
  %81 = vmatprep.subr.mxu0 0.0
  %82 = vmatpush2.msra.mxu0 0.0
  %83 = vmatprep.subr.mxu0 0.0
  %84 = vmatpush2.msra.mxu0 0.0
  %85 = vmatprep.subr.mxu0 0.0
  %86 = vmatpush2.msra.mxu0 0.0
  %87 = vmatprep.subr.mxu0 0.0
  %88 = vmatpush2.msra.mxu0 0.0
  %89 = vmatprep.subr.mxu0 0.0
  %90 = vmatpush2.msra.mxu0 0.0
  %91 = vmatprep.subr.mxu0 0.0
  %92 = vmatpush2.msra.mxu0 0.0
  %93 = vmatprep.subr.mxu0 0.0
  %94 = vmatpush2.msra.mxu0 0.0
  %95 = vmatprep.subr.mxu0 0.0
  %96 = vmatpush2.msra.mxu0 0.0
  %97 = vmatprep.subr.mxu0 0.0
  %98 = vmatpush2.msra.mxu0 0.0
  %99 = vmatprep.subr.mxu0 0.0
  %100 = vmatpush2.msra.mxu0 0.0
  %101 = vmatprep.subr.mxu0 0.0
  %102 = vmatpush2.msra.mxu0 0.0
  %103 = vmatprep.subr.mxu0 0.0
  %104 = vmatpush2.msra.mxu0 0.0
  %105 = vmatprep.mubr.f32.mxu0 0.0
  %106 = vmatmul.mubr.f32.gmra.mxu0 %v36
  %v107 = vpop.f32.mrf.mxu0
  %v108 = vadd.f32 0.0, %v107
  %v109 = vpop.f32.mrf.mxu0
  %110 = vmatprep.mubr.f32.mxu0 0.0
  %111 = vmatmul.mubr.f32.gmra.mxu0 %v39
  %v112 = vpop.f32.mrf.mxu0
  %v113 = vadd.f32 0.0, %v112
  %v114 = vpop.f32.mrf.mxu0
  %115 = vdwg.mxu0
  %v117 = vsel %vm34, %v28, 0
  %v120 = vsel %vm34, %v29, 0
  %122 = vmatprep.subr.mxu0 0.0
  %123 = vmatpush1.msra.mxu0 0.0
  %124 = vmatprep.subr.mxu0 0.0
  %125 = vmatpush1.msra.mxu0 0.0
  %126 = vmatprep.subr.mxu0 0.0
  %127 = vmatpush1.msra.mxu0 0.0
  %128 = vmatprep.subr.mxu0 0.0
  %129 = vmatpush1.msra.mxu0 0.0
  %130 = vmatprep.subr.mxu0 0.0
  %131 = vmatpush1.msra.mxu0 0.0
  %132 = vmatprep.subr.mxu0 0.0
  %133 = vmatpush1.msra.mxu0 0.0
  %134 = vmatprep.subr.mxu0 0.0
  %135 = vmatpush1.msra.mxu0 0.0
  %136 = vmatprep.subr.mxu0 0.0
  %137 = vmatpush1.msra.mxu0 0.0
  %138 = vmatprep.subr.mxu0 0.0
  %139 = vmatpush1.msra.mxu0 0.0
  %140 = vmatprep.subr.mxu0 0.0
  %141 = vmatpush1.msra.mxu0 0.0
  %142 = vmatprep.subr.mxu0 0.0
  %143 = vmatpush1.msra.mxu0 0.0
  %144 = vmatprep.subr.mxu0 0.0
  %145 = vmatpush1.msra.mxu0 0.0
  %146 = vmatprep.subr.mxu0 0.0
  %147 = vmatpush1.msra.mxu0 0.0
  %148 = vmatprep.subr.mxu0 0.0
  %149 = vmatpush1.msra.mxu0 0.0
  %150 = vmatprep.subr.mxu0 0.0
  %151 = vmatpush1.msra.mxu0 0.0
  %152 = vmatprep.subr.mxu0 0.0
  %153 = vmatpush1.msra.mxu0 %v30
  %154 = vmatprep.subr.mxu0 0.0
  %155 = vmatpush2.msra.mxu0 0.0
  %156 = vmatprep.subr.mxu0 0.0
  %157 = vmatpush2.msra.mxu0 0.0
  %158 = vmatprep.subr.mxu0 0.0
  %159 = vmatpush2.msra.mxu0 0.0
  %160 = vmatprep.subr.mxu0 0.0
  %161 = vmatpush2.msra.mxu0 0.0
  %162 = vmatprep.subr.mxu0 0.0
  %163 = vmatpush2.msra.mxu0 0.0
  %164 = vmatprep.subr.mxu0 0.0
  %165 = vmatpush2.msra.mxu0 0.0
  %166 = vmatprep.subr.mxu0 0.0
  %167 = vmatpush2.msra.mxu0 0.0
  %168 = vmatprep.subr.mxu0 0.0
  %169 = vmatpush2.msra.mxu0 0.0
  %170 = vmatprep.subr.mxu0 0.0
  %171 = vmatpush2.msra.mxu0 0.0
  %172 = vmatprep.subr.mxu0 0.0
  %173 = vmatpush2.msra.mxu0 0.0
  %174 = vmatprep.subr.mxu0 0.0
  %175 = vmatpush2.msra.mxu0 0.0
  %176 = vmatprep.subr.mxu0 0.0
  %177 = vmatpush2.msra.mxu0 0.0
  %178 = vmatprep.subr.mxu0 0.0
  %179 = vmatpush2.msra.mxu0 0.0
  %180 = vmatprep.subr.mxu0 0.0
  %181 = vmatpush2.msra.mxu0 0.0
  %182 = vmatprep.subr.mxu0 0.0
  %183 = vmatpush2.msra.mxu0 0.0
  %184 = vmatprep.subr.mxu0 0.0
  %185 = vmatpush2.msra.mxu0 0.0
  %186 = vmatprep.mubr.f32.mxu0 0.0
  %187 = vmatmul.mubr.f32.gmra.mxu0 %v117
  %v188 = vpop.f32.mrf.mxu0
  %v189 = vadd.f32 %v108, %v188
  %v190 = vpop.f32.mrf.mxu0
  %191 = vmatprep.mubr.f32.mxu0 0.0
  %192 = vmatmul.mubr.f32.gmra.mxu0 %v120
  %v193 = vpop.f32.mrf.mxu0
  %v194 = vadd.f32 %v113, %v193
  %v195 = vpop.f32.mrf.mxu0
  %196 = vdwg.mxu0
  %198 = vset.pattern.permute.xlu0 0
  %199 = vperm.xlu0 %198, %v26
  %v200 = vpop.permute.xlu0 %199
  %203 = vset.pattern.permute.xlu0 0
  %204 = vperm.xlu0 %203, %v27
  %v205 = vpop.permute.xlu0 %204
  %v207 = vadd.f32 %v189, %v200
  %v208 = vadd.f32 %v194, %v205
  %v209 = vtanh.pop %v207
  %v210 = vtanh.pop %v208
  %v211 = vld [vmem:[%s4] sm:$0xff]
  %v212 = vld [vmem:[%s4 + $0x8] sm:$0xff]
  %213 = vset.pattern.permute.xlu0 1
  %214 = vperm.xlu0 %213, %v26
  %v215 = vpop.permute.xlu0 %214
  %217 = vset.pattern.permute.xlu0 1
  %218 = vperm.xlu0 %217, %v27
  %v219 = vpop.permute.xlu0 %218
  %vm221 = vcmask 130048
  %v223 = vsel %vm221, %v211, 0
  %v226 = vsel %vm221, %v212, 0
  %228 = vmatprep.subr.mxu0 0.0
  %229 = vmatpush1.msra.mxu0 0.0
  %230 = vmatprep.subr.mxu0 0.0
  %231 = vmatpush1.msra.mxu0 0.0
  %232 = vmatprep.subr.mxu0 0.0
  %233 = vmatpush1.msra.mxu0 0.0
  %234 = vmatprep.subr.mxu0 0.0
  %235 = vmatpush1.msra.mxu0 0.0
  %236 = vmatprep.subr.mxu0 0.0
  %237 = vmatpush1.msra.mxu0 0.0
  %238 = vmatprep.subr.mxu0 0.0
  %239 = vmatpush1.msra.mxu0 0.0
  %240 = vmatprep.subr.mxu0 0.0
  %241 = vmatpush1.msra.mxu0 0.0
  %242 = vmatprep.subr.mxu0 0.0
  %243 = vmatpush1.msra.mxu0 0.0
  %244 = vmatprep.subr.mxu0 0.0
  %245 = vmatpush1.msra.mxu0 0.0
  %246 = vmatprep.subr.mxu0 0.0
  %247 = vmatpush1.msra.mxu0 0.0
  %248 = vmatprep.subr.mxu0 0.0
  %249 = vmatpush1.msra.mxu0 0.0
  %250 = vmatprep.subr.mxu0 0.0
  %251 = vmatpush1.msra.mxu0 0.0
  %252 = vmatprep.subr.mxu0 0.0
  %253 = vmatpush1.msra.mxu0 0.0
  %254 = vmatprep.subr.mxu0 0.0
  %255 = vmatpush1.msra.mxu0 0.0
  %256 = vmatprep.subr.mxu0 0.0
  %257 = vmatpush1.msra.mxu0 %v210
  %258 = vmatprep.subr.mxu0 0.0
  %259 = vmatpush1.msra.mxu0 %v209
  %260 = vmatprep.subr.mxu0 0.0
  %261 = vmatpush2.msra.mxu0 0.0
  %262 = vmatprep.subr.mxu0 0.0
  %263 = vmatpush2.msra.mxu0 0.0
  %264 = vmatprep.subr.mxu0 0.0
  %265 = vmatpush2.msra.mxu0 0.0
  %266 = vmatprep.subr.mxu0 0.0
  %267 = vmatpush2.msra.mxu0 0.0
  %268 = vmatprep.subr.mxu0 0.0
  %269 = vmatpush2.msra.mxu0 0.0
  %270 = vmatprep.subr.mxu0 0.0
  %271 = vmatpush2.msra.mxu0 0.0
  %272 = vmatprep.subr.mxu0 0.0
  %273 = vmatpush2.msra.mxu0 0.0
  %274 = vmatprep.subr.mxu0 0.0
  %275 = vmatpush2.msra.mxu0 0.0
  %276 = vmatprep.subr.mxu0 0.0
  %277 = vmatpush2.msra.mxu0 0.0
  %278 = vmatprep.subr.mxu0 0.0
  %279 = vmatpush2.msra.mxu0 0.0
  %280 = vmatprep.subr.mxu0 0.0
  %281 = vmatpush2.msra.mxu0 0.0
  %282 = vmatprep.subr.mxu0 0.0
  %283 = vmatpush2.msra.mxu0 0.0
  %284 = vmatprep.subr.mxu0 0.0
  %285 = vmatpush2.msra.mxu0 0.0
  %286 = vmatprep.subr.mxu0 0.0
  %287 = vmatpush2.msra.mxu0 0.0
  %288 = vmatprep.subr.mxu0 0.0
  %289 = vmatpush2.msra.mxu0 0.0
  %290 = vmatprep.subr.mxu0 0.0
  %291 = vmatpush2.msra.mxu0 0.0
  %292 = vmatprep.mubr.f32.mxu0 0.0
  %293 = vmatmul.mubr.f32.gmra.mxu0 %v223
  %v294 = vpop.f32.mrf.mxu0
  %v295 = vadd.f32 %v215, %v294
  %v296 = vpop.f32.mrf.mxu0
  %297 = vmatprep.mubr.f32.mxu0 0.0
  %298 = vmatmul.mubr.f32.gmra.mxu0 %v226
  %v299 = vpop.f32.mrf.mxu0
  %v300 = vadd.f32 %v219, %v299
  %v301 = vpop.f32.mrf.mxu0
  %302 = vdwg.mxu0
  %v303 = vtanh.pop %v295
  %v304 = vtanh.pop %v300
  %v305 = vld [vmem:[%s5] sm:$0xff]
  %306 = vset.pattern.permute.xlu0 2
  %307 = vperm.xlu0 %306, %v26
  %v308 = vpop.permute.xlu0 %307
  %v311 = vsel %vm221, %v305, 0
  %313 = vmatprep.subr.mxu0 0.0
  %314 = vmatpush1.msra.mxu0 0.0
  %315 = vmatprep.subr.mxu0 0.0
  %316 = vmatpush1.msra.mxu0 0.0
  %317 = vmatprep.subr.mxu0 0.0
  %318 = vmatpush1.msra.mxu0 0.0
  %319 = vmatprep.subr.mxu0 0.0
  %320 = vmatpush1.msra.mxu0 0.0
  %321 = vmatprep.subr.mxu0 0.0
  %322 = vmatpush1.msra.mxu0 0.0
  %323 = vmatprep.subr.mxu0 0.0
  %324 = vmatpush1.msra.mxu0 0.0
  %325 = vmatprep.subr.mxu0 0.0
  %326 = vmatpush1.msra.mxu0 0.0
  %327 = vmatprep.subr.mxu0 0.0
  %328 = vmatpush1.msra.mxu0 0.0
  %329 = vmatprep.subr.mxu0 0.0
  %330 = vmatpush1.msra.mxu0 0.0
  %331 = vmatprep.subr.mxu0 0.0
  %332 = vmatpush1.msra.mxu0 0.0
  %333 = vmatprep.subr.mxu0 0.0
  %334 = vmatpush1.msra.mxu0 0.0
  %335 = vmatprep.subr.mxu0 0.0
  %336 = vmatpush1.msra.mxu0 0.0
  %337 = vmatprep.subr.mxu0 0.0
  %338 = vmatpush1.msra.mxu0 0.0
  %339 = vmatprep.subr.mxu0 0.0
  %340 = vmatpush1.msra.mxu0 0.0
  %341 = vmatprep.subr.mxu0 0.0
  %342 = vmatpush1.msra.mxu0 %v304
  %343 = vmatprep.subr.mxu0 0.0
  %344 = vmatpush1.msra.mxu0 %v303
  %345 = vmatprep.subr.mxu0 0.0
  %346 = vmatpush2.msra.mxu0 0.0
  %347 = vmatprep.subr.mxu0 0.0
  %348 = vmatpush2.msra.mxu0 0.0
  %349 = vmatprep.subr.mxu0 0.0
  %350 = vmatpush2.msra.mxu0 0.0
  %351 = vmatprep.subr.mxu0 0.0
  %352 = vmatpush2.msra.mxu0 0.0
  %353 = vmatprep.subr.mxu0 0.0
  %354 = vmatpush2.msra.mxu0 0.0
  %355 = vmatprep.subr.mxu0 0.0
  %356 = vmatpush2.msra.mxu0 0.0
  %357 = vmatprep.subr.mxu0 0.0
  %358 = vmatpush2.msra.mxu0 0.0
  %359 = vmatprep.subr.mxu0 0.0
  %360 = vmatpush2.msra.mxu0 0.0
  %361 = vmatprep.subr.mxu0 0.0
  %362 = vmatpush2.msra.mxu0 0.0
  %363 = vmatprep.subr.mxu0 0.0
  %364 = vmatpush2.msra.mxu0 0.0
  %365 = vmatprep.subr.mxu0 0.0
  %366 = vmatpush2.msra.mxu0 0.0
  %367 = vmatprep.subr.mxu0 0.0
  %368 = vmatpush2.msra.mxu0 0.0
  %369 = vmatprep.subr.mxu0 0.0
  %370 = vmatpush2.msra.mxu0 0.0
  %371 = vmatprep.subr.mxu0 0.0
  %372 = vmatpush2.msra.mxu0 0.0
  %373 = vmatprep.subr.mxu0 0.0
  %374 = vmatpush2.msra.mxu0 0.0
  %375 = vmatprep.subr.mxu0 0.0
  %376 = vmatpush2.msra.mxu0 0.0
  %377 = vmatprep.mubr.f32.mxu0 0.0
  %378 = vmatmul.mubr.f32.gmra.mxu0 %v311
  %v379 = vpop.f32.mrf.mxu0
  %v380 = vadd.f32 %v308, %v379
  %v381 = vpop.f32.mrf.mxu0
  %382 = vdwg.mxu0
  %vm383 = vcmask 15360
  %384 = vst.msk [vmem:[%s7] sm:$0xff] %vm383, %v380
  // Predicated region
  $region30: #{tpu_custom_call.1} parent=0 // pred_check
    _
  $region31: #{tpu_custom_call.1} parent=0 // pred_check_branch
    %386 = sbr.rel (0) target = $region33
  $region32: #{tpu_custom_call.1} parent=0 // pred_region
    _
  $region33: #{tpu_custom_call.1} parent=0 // pred_fallthru
    _
  // Predicated region
  $region34: #{tpu_custom_call.1} parent=0 // pred_check
    _
  $region35: #{tpu_custom_call.1} parent=0 // pred_check_branch
    %388 = sbr.rel (0) target = $region37
  $region36: #{tpu_custom_call.1} parent=0 // pred_region
    _
  $region37: #{tpu_custom_call.1} parent=0 // pred_fallthru
    _

</llo_original>
